<compile_context>
chip_gen: v7x
topology: tpu7x:2x2x1
jax: 0.10.0
libtpu: 0.0.40
codegen_flags: <defaults>
</compile_context>

<pallas_src>
import functools
from typing import NamedTuple

import jax
import jax.numpy as jnp
from jax.experimental import pallas as pl
from jax.experimental.pallas import tpu as pltpu


def _round_up(x: int, m: int) -> int:
    return (x + m - 1) // m * m


def _vmem_capacity_bytes() -> int:
    try:
        return int(pltpu.get_tpu_info().vmem_capacity_bytes)
    except Exception:
        return 64 * 2**20   # conservative fallback (v7x-sized VMEM)


def _pick_chunk(requested: int, total: int) -> int:
    """Pick a d_ff chunk size: a multiple of 128 that (ideally) divides `total`."""
    requested = max(128, min(requested, total))
    requested = (requested // 128) * 128
    for cand in range(requested, 127, -128):
        if total % cand == 0:
            if cand * 2 >= requested:      # don't shrink more than 2x just to divide
                return cand
            break
    return requested                        # accept a little d_ff padding instead


def _per_step_bytes(tm: int, tkf: int, dm_p: int, in_b: int, out_b: int) -> int:
    return (2 * tm * dm_p * in_b            # x row tile (double-buffered)
            + 2 * dm_p * (2 * tkf) * in_b   # stacked [W1^T | W3^T] chunk
            + 2 * tkf * dm_p * in_b         # W2^T chunk
            + 2 * tm * dm_p * out_b         # output tile
            + tm * dm_p * 4                 # f32 accumulator scratch
            + 4 * tm * tkf * 4)             # h / h1 / h3 / gated intermediates (f32)


class SwiGLUPlan(NamedTuple):
    w13t_p: jax.Array     # (dm_p, 2*dff_p), chunk-interleaved [W1^T_j | W3^T_j]
    w2t_p: jax.Array      # (dff_p, dm_p)
    d_model: int
    d_ff: int
    dm_p: int
    dff_p: int
    tkf: int
    tm_max: int
    min_tm: int
    compute_dtype: jnp.dtype
    vmem_cap: int


def swiglu_ffn_kernel(x_ref, w13_ref, w2t_ref, o_ref, acc_ref, *, tkf):
    # Grid axes: i = row tile (parallel), j = d_ff chunk (arbitrary / reduction).
    j = pl.program_id(1)

    @pl.when(j == 0)
    def _():
        acc_ref[...] = jnp.zeros_like(acc_ref)

    x = x_ref[...]                                                   # (tm, dm_p)
    # One wide MXU matmul against the stacked [W1^T_j | W3^T_j] chunk,
    # f32 accumulation; the split is lane-clean (tkf is a multiple of 128).
    h = jnp.dot(x, w13_ref[...], preferred_element_type=jnp.float32)  # (tm, 2*tkf)
    h1 = h[:, :tkf]
    h3 = h[:, tkf:]
    # SwiGLU gate in f32 (sigmoid on EUP, multiplies on VPU); cast back to the
    # MXU compute dtype only for the second matmul.
    gated = (h1 * jax.nn.sigmoid(h1)) * h3
    acc_ref[...] += jnp.dot(gated.astype(w2t_ref.dtype), w2t_ref[...],
                            preferred_element_type=jnp.float32)

    @pl.when(j == pl.num_programs(1) - 1)
    def _():
        o_ref[...] = acc_ref[...].astype(o_ref.dtype)


def swiglu_ffn_prepare(w1, w3, w2, *, tm=None, tkf=None,
                       compute_dtype=jnp.bfloat16) -> SwiGLUPlan:
    """One-time weight prep (transpose / pad / cast / stack) + tile planning."""
    d_ff, d_model = w1.shape
    assert w3.shape == (d_ff, d_model) and w2.shape == (d_model, d_ff)

    cd = jnp.dtype(compute_dtype)
    in_b = cd.itemsize
    min_tm = {4: 8, 2: 16, 1: 32}.get(in_b, 8)

    vmem_cap = _vmem_capacity_bytes()
    budget = int(0.75 * vmem_cap)

    # Generation-aware defaults: 128 MiB VMEM (v5e/v6e) -> big tiles;
    # 64 MiB VMEM (v7x) -> keep tm large, shrink the d_ff chunk instead.
    if tm is None:
        tm = 1024 if vmem_cap >= 96 * 2**20 else 512
    if tkf is None:
        tkf = 512 if vmem_cap >= 96 * 2**20 else 256

    dm_p = _round_up(d_model, 128)
    dff128 = _round_up(d_ff, 128)
    tkf = _pick_chunk(tkf, dff128)

    tm_max = _round_up(max(tm, min_tm), min_tm)
    # Shrink until the per-step footprint fits in VMEM; prefer shrinking tkf
    # (tm sets arithmetic intensity -> weight HBM re-streaming).
    while _per_step_bytes(tm_max, tkf, dm_p, in_b, 4) > budget:
        if tkf > 128:
            tkf //= 2
        elif tm_max > min_tm:
            tm_max = _round_up(tm_max // 2, min_tm)
        else:
            break
    dff_p = _round_up(dff128, tkf)
    nj = dff_p // tkf

    # Zero-padding is exact: padded d_model cols / d_ff cols all contribute 0
    # (SiLU(0) = 0) and padded rows are sliced off after the kernel.
    w1t_p = jnp.pad(w1.T.astype(cd), ((0, dm_p - d_model), (0, dff_p - d_ff)))
    w3t_p = jnp.pad(w3.T.astype(cd), ((0, dm_p - d_model), (0, dff_p - d_ff)))
    # Interleave the W1^T / W3^T chunks so block j is [W1^T_j | W3^T_j].
    w13t_p = jnp.concatenate(
        [w1t_p.reshape(dm_p, nj, tkf), w3t_p.reshape(dm_p, nj, tkf)], axis=2
    ).reshape(dm_p, 2 * dff_p)
    w2t_p = jnp.pad(w2.T.astype(cd), ((0, dff_p - d_ff), (0, dm_p - d_model)))

    return SwiGLUPlan(w13t_p, w2t_p, d_model, d_ff, dm_p, dff_p, tkf,
                      tm_max, min_tm, cd, vmem_cap)


def swiglu_ffn_apply(plan: SwiGLUPlan, x, *, tm=None):
    """Hot path: x (..., d_model) -> (..., d_model) using a prepared plan."""
    assert x.shape[-1] == plan.d_model
    orig_shape = x.shape
    out_dtype = x.dtype

    x2d = x.reshape(-1, plan.d_model).astype(plan.compute_dtype)
    n = x2d.shape[0]

    tm = plan.tm_max if tm is None else tm
    tm = max(plan.min_tm, min(tm, _round_up(n, plan.min_tm)))
    tm = _round_up(tm, plan.min_tm)
    n_p = _round_up(n, tm)
    dm_p, dff_p, tkf = plan.dm_p, plan.dff_p, plan.tkf

    # Only activations are padded per call (weights were prepped once).
    x_p = jnp.pad(x2d, ((0, n_p - n), (0, dm_p - plan.d_model)))

    grid = (n_p // tm, dff_p // tkf)

    in_b = jnp.dtype(plan.compute_dtype).itemsize
    out_b = jnp.dtype(out_dtype).itemsize
    per_step = _per_step_bytes(tm, tkf, dm_p, in_b, out_b)
    vmem_limit = int(min(max(int(1.25 * per_step), 32 * 2**20), plan.vmem_cap))

    kernel = functools.partial(swiglu_ffn_kernel, tkf=tkf)

    out_p = pl.pallas_call(
        kernel,
        out_shape=jax.ShapeDtypeStruct((n_p, dm_p), out_dtype),
        grid_spec=pltpu.PrefetchScalarGridSpec(
            num_scalar_prefetch=0,
            grid=grid,
            in_specs=[
                pl.BlockSpec((tm, dm_p), lambda i, j: (i, 0)),        # x row tile
                pl.BlockSpec((dm_p, 2 * tkf), lambda i, j: (0, j)),   # [W1^T|W3^T] chunk
                pl.BlockSpec((tkf, dm_p), lambda i, j: (j, 0)),       # W2^T chunk
            ],
            out_specs=pl.BlockSpec((tm, dm_p), lambda i, j: (i, 0)),
            scratch_shapes=[pltpu.VMEM((tm, dm_p), jnp.float32)],
        ),
        compiler_params=pltpu.CompilerParams(
            dimension_semantics=("parallel", "arbitrary"),
            vmem_limit_bytes=vmem_limit,
        ),
    )(x_p, plan.w13t_p, plan.w2t_p)

    out2d = out_p[:n, :plan.d_model]
    return out2d.reshape(orig_shape)


def swiglu_ffn(x, w1, w3, w2, *, tm=None, tkf=None, compute_dtype=jnp.bfloat16):
    """Convenience one-shot wrapper. For repeated calls, reuse the plan."""
    plan = swiglu_ffn_prepare(w1, w3, w2, tm=tm, tkf=tkf,
                              compute_dtype=compute_dtype)
    return swiglu_ffn_apply(plan, x, tm=tm)


def _trunc_normal(key, shape, std, dtype=jnp.float32):
    # matches torch trunc_normal_(mean=0, std=std, a=-3*std, b=3*std)
    return (jax.random.truncated_normal(key, -3.0, 3.0, shape, dtype) * std).astype(dtype)


def _reference(x, w1, w3, w2, compute_dtype=jnp.float32):
    cd = jnp.dtype(compute_dtype)
    xc, w1c, w3c, w2c = (a.astype(cd) for a in (x, w1, w3, w2))
    h1 = jnp.einsum('...d,fd->...f', xc, w1c, preferred_element_type=jnp.float32)
    h3 = jnp.einsum('...d,fd->...f', xc, w3c, preferred_element_type=jnp.float32)
    g = (h1 * jax.nn.sigmoid(h1) * h3).astype(cd)
    return jnp.einsum('...f,df->...d', g, w2c,
                      preferred_element_type=jnp.float32).astype(x.dtype)


if __name__ == "__main__":
    batch, seq, d_model, d_ff = 2, 8, 32, 64
    key = jax.random.PRNGKey(0)
    kx, k1, k2, k3 = jax.random.split(key, 4)

    x = jax.random.normal(kx, (batch, seq, d_model), dtype=jnp.float32)

    std = (2.0 / (d_model + d_ff)) ** 0.5
    w1 = _trunc_normal(k1, (d_ff, d_model), std)   # Linear(d_model -> d_ff)
    w3 = _trunc_normal(k3, (d_ff, d_model), std)   # Linear(d_model -> d_ff)
    w2 = _trunc_normal(k2, (d_model, d_ff), std)   # Linear(d_ff -> d_model)

    # Weight prep (transpose / pad / cast / stack) hoisted out of the hot path.
    plan = swiglu_ffn_prepare(w1, w3, w2)
    out = jax.block_until_ready(swiglu_ffn_apply(plan, x))

    ref_bf16 = _reference(x, w1, w3, w2, compute_dtype=jnp.bfloat16)
    ref_f32 = _reference(x, w1, w3, w2, compute_dtype=jnp.float32)

    assert out.shape == x.shape
    assert jnp.allclose(out, ref_bf16, atol=2e-2, rtol=2e-2), "mismatch vs bf16 reference"
    assert jnp.allclose(out, ref_f32, atol=6e-2, rtol=6e-2), "mismatch vs f32 reference"

    print("KERNEL_OK")
</pallas_src>

<mosaic_0001>
module attributes {stable_mosaic.version = 11 : i64} {
  func.func @swiglu_ffn_kernel(%arg0: i32, %arg1: i32, %arg2: memref<16x128xbf16, #tpu.memory_space<vmem>>, %arg3: memref<128x256xbf16, #tpu.memory_space<vmem>>, %arg4: memref<128x128xbf16, #tpu.memory_space<vmem>>, %arg5: memref<16x128xf32, #tpu.memory_space<vmem>>, %arg6: memref<16x128xf32, #tpu.memory_space<vmem>>) attributes {dimension_semantics = [#tpu.dimension_semantics<parallel>, #tpu.dimension_semantics<arbitrary>], iteration_bounds = array<i64: 1, 1>, scalar_prefetch = 0 : i64, scratch_operands = 1 : i64, tpu.core_type = #tpu.core_type<tc>, window_params = [{transform_indices = @transform_0, window_bounds = array<i64: 16, 128>}, {transform_indices = @transform_1, window_bounds = array<i64: 128, 256>}, {transform_indices = @transform_2, window_bounds = array<i64: 128, 128>}, {transform_indices = @transform_3, window_bounds = array<i64: 16, 128>}]} {
    %c0_i32 = arith.constant 0 : i32
    %0 = arith.cmpi eq, %arg1, %c0_i32 : i32
    %1 = arith.extui %0 : i1 to i32
    %c0_i32_0 = arith.constant 0 : i32
    %2 = arith.cmpi ne, %1, %c0_i32_0 : i32
    scf.if %2 {
      %cst_14 = arith.constant 0.000000e+00 : f32
      %24 = vector.broadcast %cst_14 : f32 to vector<16x128xf32>
      %c0_15 = arith.constant 0 : index
      %c0_16 = arith.constant 0 : index
      %25 = vector.load %arg6[%c0_15, %c0_16] : memref<16x128xf32, #tpu.memory_space<vmem>>, vector<16x128xf32>
      tpu.vector_store %arg6[%c0_15, %c0_16], %24 {strides = array<i32>} : memref<16x128xf32, #tpu.memory_space<vmem>>, vector<16x128xf32>,
    } else {
    }
    %c0 = arith.constant 0 : index
    %c0_1 = arith.constant 0 : index
    %3 = vector.load %arg2[%c0, %c0_1] : memref<16x128xbf16, #tpu.memory_space<vmem>>, vector<16x128xbf16>
    %c0_2 = arith.constant 0 : index
    %c0_3 = arith.constant 0 : index
    %4 = vector.load %arg3[%c0_2, %c0_3] : memref<128x256xbf16, #tpu.memory_space<vmem>>, vector<128x256xbf16>
    %cst = arith.constant dense<0.000000e+00> : vector<16x256xf32>
    %5 = tpu.matmul %3, %4, %cst {dimension_numbers = #tpu.dot_dimension_numbers<[1], [0], [0], [1], [0, 0, 1, 1], [], []>} : vector<16x128xbf16>, vector<128x256xbf16>, vector<16x256xf32> -> vector<16x256xf32>
    %6 = vector.extract_strided_slice %5 {offsets = [0, 0], sizes = [16, 128], strides = [1, 1]} : vector<16x256xf32> to vector<16x128xf32>
    %7 = vector.extract_strided_slice %5 {offsets = [0, 128], sizes = [16, 128], strides = [1, 1]} : vector<16x256xf32> to vector<16x128xf32>
    %8 = arith.negf %6 : vector<16x128xf32>
    %9 = math.exp %8 : vector<16x128xf32>
    %cst_4 = arith.constant 1.000000e+00 : f32
    %10 = vector.broadcast %cst_4 : f32 to vector<16x128xf32>
    %11 = arith.addf %10, %9 : vector<16x128xf32>
    %12 = arith.divf %10, %11 : vector<16x128xf32>
    %13 = arith.mulf %6, %12 : vector<16x128xf32>
    %14 = arith.mulf %13, %7 : vector<16x128xf32>
    %c0_5 = arith.constant 0 : index
    %c0_6 = arith.constant 0 : index
    %15 = vector.load %arg6[%c0_5, %c0_6] : memref<16x128xf32, #tpu.memory_space<vmem>>, vector<16x128xf32>
    %16 = arith.truncf %14 : vector<16x128xf32> to vector<16x128xbf16>
    %c0_7 = arith.constant 0 : index
    %c0_8 = arith.constant 0 : index
    %17 = vector.load %arg4[%c0_7, %c0_8] : memref<128x128xbf16, #tpu.memory_space<vmem>>, vector<128x128xbf16>
    %cst_9 = arith.constant dense<0.000000e+00> : vector<16x128xf32>
    %18 = tpu.matmul %16, %17, %cst_9 {dimension_numbers = #tpu.dot_dimension_numbers<[1], [0], [0], [1], [0, 0, 1, 1], [], []>} : vector<16x128xbf16>, vector<128x128xbf16>, vector<16x128xf32> -> vector<16x128xf32>
    %19 = arith.addf %15, %18 : vector<16x128xf32>
    %c0_10 = arith.constant 0 : index
    %c0_11 = arith.constant 0 : index
    %20 = vector.load %arg6[%c0_10, %c0_11] : memref<16x128xf32, #tpu.memory_space<vmem>>, vector<16x128xf32>
    tpu.vector_store %arg6[%c0_10, %c0_11], %19 {strides = array<i32>} : memref<16x128xf32, #tpu.memory_space<vmem>>, vector<16x128xf32>,
    %c0_i32_12 = arith.constant 0 : i32
    %21 = arith.cmpi eq, %arg1, %c0_i32_12 : i32
    %22 = arith.extui %21 : i1 to i32
    %c0_i32_13 = arith.constant 0 : i32
    %23 = arith.cmpi ne, %22, %c0_i32_13 : i32
    scf.if %23 {
      %c0_14 = arith.constant 0 : index
      %c0_15 = arith.constant 0 : index
      %24 = vector.load %arg6[%c0_14, %c0_15] : memref<16x128xf32, #tpu.memory_space<vmem>>, vector<16x128xf32>
      %c0_16 = arith.constant 0 : index
      %c0_17 = arith.constant 0 : index
      %25 = vector.load %arg5[%c0_16, %c0_17] : memref<16x128xf32, #tpu.memory_space<vmem>>, vector<16x128xf32>
      tpu.vector_store %arg5[%c0_16, %c0_17], %24 {strides = array<i32>} : memref<16x128xf32, #tpu.memory_space<vmem>>, vector<16x128xf32>,
    } else {
    }
    return
  }
  func.func @transform_0(%arg0: i32, %arg1: i32) -> (i32, i32) {
    %c0_i32 = arith.constant 0 : i32
    %c0_i32_0 = arith.constant 0 : i32
    return %arg0, %c0_i32 : i32, i32
  }
  func.func @transform_1(%arg0: i32, %arg1: i32) -> (i32, i32) {
    %c0_i32 = arith.constant 0 : i32
    %c0_i32_0 = arith.constant 0 : i32
    return %c0_i32, %arg1 : i32, i32
  }
  func.func @transform_2(%arg0: i32, %arg1: i32) -> (i32, i32) {
    %c0_i32 = arith.constant 0 : i32
    %c0_i32_0 = arith.constant 0 : i32
    return %arg1, %c0_i32 : i32, i32
  }
  func.func @transform_3(%arg0: i32, %arg1: i32) -> (i32, i32) {
    %c0_i32 = arith.constant 0 : i32
    %c0_i32_0 = arith.constant 0 : i32
    return %arg0, %c0_i32 : i32, i32
  }
}

</mosaic_0001>

<llo_original>
// kernel: tpu_custom_call.1
$region0: #{tpu_custom_call.1}
  #allocation0 [shape = 'u32[]', space=smem, size = 0x4, offset = 0x4, fixed_abs, tag = 'smem constant byte address 0x4 - core index']
  #allocation1 [shape = 'u32[144,128]{1,0:T(1,128)}', space=vmem, size = 0x12000, scoped, tag = 'internal scratch']
  #allocation2 [shape = 'f32[16,128]{1,0:T(8,128)}', space=vmem, size = 0x2000, scoped, tag = 'scratch operand']
  %s0 = inlined_call_operand.hbm [shape: bf16[16,128], index: 0, kind: input, shape index: {}]
  %s1 = inlined_call_operand.hbm [shape: bf16[128,256], index: 1, kind: input, shape index: {}]
  %s2 = inlined_call_operand.hbm [shape: bf16[128,128], index: 2, kind: input, shape index: {}]
  %s3 = inlined_call_operand.hbm [shape: f32[16,128], index: 3, kind: output, shape index: {}]
  %s4 = sld [smem:[#allocation0]]
  $region42: #{tpu_custom_call.1} parent=0
    _
  %s6 = ssub.s32 1, %s4
  %s7 = scalar_select 0, %s6, %s4
  $region1: #{tpu_custom_call.1} parent=0
    #allocation3 [shape = 'u8[4096]{0}', space=vmem, size = 0x1000, scoped, tag = 'input window, operand 0, single buffered']
    #allocation4 [shape = 's32[1]{0}', space=sflag, size = 0x4, scoped, tag = 'scoped memory for tpu_custom_call.1']
    #allocation5 [shape = 's32[1]{0}', space=sflag, size = 0x4, scoped, tag = 'scoped memory for tpu_custom_call.1']
    #allocation6 [shape = 'u8[65536]{0}', space=vmem, size = 0x10000, scoped, tag = 'input window, operand 1, single buffered']
    #allocation7 [shape = 's32[1]{0}', space=sflag, size = 0x4, scoped, tag = 'scoped memory for tpu_custom_call.1']
    #allocation8 [shape = 'u8[32768]{0}', space=vmem, size = 0x8000, scoped, tag = 'input window, operand 2, single buffered']
    #allocation9 [shape = 'u8[8192]{0}', space=vmem, size = 0x2000, scoped, tag = 'output window, operand 0, single buffered']
    %8 = vsyncpa [#allocation4], 0
    %9 = vsyncpa [#allocation7], 0
    %10 = vsyncpa [#allocation5], 0
    // Predicated region
    $region2: #{tpu_custom_call.1} parent=1 // pred_check
      _
    $region3: #{tpu_custom_call.1} parent=1 // pred_check_branch
      %12 = sbr.rel (0) target = $region5
    $region4: #{tpu_custom_call.1} parent=1 // pred_region
      %s14 = ssub.s32 128, 128
      %15 = vsyncadd [#allocation4], %s14
      %s16 = sshll.u32 [#allocation3], 4
      %s17 = int_to_ptr.vmem [resolvable:$true] %s16
      %22 = dma.hbm_to_vmem [thread:$0]  %s0, 128, %s17, [#allocation4], 64, 64, 4
    $region5: #{tpu_custom_call.1} parent=1 // pred_fallthru
      _
    // Predicated region
    $region6: #{tpu_custom_call.1} parent=1 // pred_check
      _
    $region7: #{tpu_custom_call.1} parent=1 // pred_check_branch
      %24 = sbr.rel (0) target = $region9
    $region8: #{tpu_custom_call.1} parent=1 // pred_region
      %s26 = ssub.s32 2048, 2048
      %27 = vsyncadd [#allocation7], %s26
      %s28 = sshll.u32 [#allocation6], 4
      %s29 = int_to_ptr.vmem [resolvable:$true] %s28
      %34 = dma.hbm_to_vmem [thread:$0]  %s1, 2048, %s29, [#allocation7], 128, 128, 8
    $region9: #{tpu_custom_call.1} parent=1 // pred_fallthru
      _
    // Predicated region
    $region10: #{tpu_custom_call.1} parent=1 // pred_check
      _
    $region11: #{tpu_custom_call.1} parent=1 // pred_check_branch
      %36 = sbr.rel (0) target = $region13
    $region12: #{tpu_custom_call.1} parent=1 // pred_region
      %s38 = ssub.s32 1024, 1024
      %39 = vsyncadd [#allocation7], %s38
      %s40 = sshll.u32 [#allocation8], 4
      %s41 = int_to_ptr.vmem [resolvable:$true] %s40
      %46 = dma.hbm_to_vmem [thread:$0]  %s2, 1024, %s41, [#allocation7], 64, 64, 4
    $region13: #{tpu_custom_call.1} parent=1 // pred_fallthru
      _
    // Predicated region
    $region14: #{tpu_custom_call.1} parent=1 // pred_check
      _
    $region15: #{tpu_custom_call.1} parent=1 // pred_check_branch
      %48 = sbr.rel (0) target = $region17
    $region16: #{tpu_custom_call.1} parent=1 // pred_region
      %49 = dma.done [#allocation4], 128
    $region17: #{tpu_custom_call.1} parent=1 // pred_fallthru
      _
    // Predicated region
    $region18: #{tpu_custom_call.1} parent=1 // pred_check
      _
    $region19: #{tpu_custom_call.1} parent=1 // pred_check_branch
      %51 = sbr.rel (0) target = $region21
    $region20: #{tpu_custom_call.1} parent=1 // pred_region
      %52 = dma.done [#allocation7], 2048
    $region21: #{tpu_custom_call.1} parent=1 // pred_fallthru
      _
    // Predicated region
    $region22: #{tpu_custom_call.1} parent=1 // pred_check
      _
    $region23: #{tpu_custom_call.1} parent=1 // pred_check_branch
      %54 = sbr.rel (0) target = $region25
    $region24: #{tpu_custom_call.1} parent=1 // pred_region
      %55 = dma.done [#allocation7], 1024
    $region25: #{tpu_custom_call.1} parent=1 // pred_fallthru
      _
    %p57 = scmp.eq.s32.totalorder 0, 0
    // Predicated region
    $region26: #{tpu_custom_call.1} parent=1 // pred_check
      %p58 = pneg %p57
    $region27: #{tpu_custom_call.1} parent=1 // pred_check_branch
      %60 = sbr.rel (%p58) target = $region29
    $region28: #{tpu_custom_call.1} parent=1 // pred_region
      %61 = vst [vmem:[#allocation2] sm:$0xff] 0.0
      %62 = vst [vmem:[#allocation2 + $0x8] sm:$0xff] 0.0
    $region29: #{tpu_custom_call.1} parent=1 // pred_fallthru
      _
    %v63 = vld [vmem:[#allocation3] sm:$0xf]
    %v64 = vld [vmem:[#allocation3 + $0x4] sm:$0xf]
    %v65 = vld [vmem:[#allocation6] sm:$0xff]
    %v66 = vld [vmem:[#allocation6 + $0x8] sm:$0xff]
    %v67 = vld [vmem:[#allocation6 + $0x10] sm:$0xff]
    %v68 = vld [vmem:[#allocation6 + $0x18] sm:$0xff]
    %v69 = vld [vmem:[#allocation6 + $0x20] sm:$0xff]
    %v70 = vld [vmem:[#allocation6 + $0x28] sm:$0xff]
    %v71 = vld [vmem:[#allocation6 + $0x30] sm:$0xff]
    %v72 = vld [vmem:[#allocation6 + $0x38] sm:$0xff]
    %v73 = vld [vmem:[#allocation6 + $0x40] sm:$0xff]
    %v74 = vld [vmem:[#allocation6 + $0x48] sm:$0xff]
    %v75 = vld [vmem:[#allocation6 + $0x50] sm:$0xff]
    %v76 = vld [vmem:[#allocation6 + $0x58] sm:$0xff]
    %v77 = vld [vmem:[#allocation6 + $0x60] sm:$0xff]
    %v78 = vld [vmem:[#allocation6 + $0x68] sm:$0xff]
    %v79 = vld [vmem:[#allocation6 + $0x70] sm:$0xff]
    %v80 = vld [vmem:[#allocation6 + $0x78] sm:$0xff]
    %v83 = vunpack.c.l.b16 %v63
    %v84 = vunpack.c.l.b16 %v64
    %v85 = vpack.c.b16 %v84, %v83
    %v103 = vunpack.c.l.b16 %v65
    %v104 = vunpack.c.h.b16 %v65
    %v105 = vunpack.c.l.b16 %v66
    %v106 = vunpack.c.h.b16 %v66
    %v107 = vunpack.c.l.b16 %v67
    %v108 = vunpack.c.h.b16 %v67
    %v109 = vunpack.c.l.b16 %v68
    %v110 = vunpack.c.h.b16 %v68
    %v111 = vunpack.c.l.b16 %v69
    %v112 = vunpack.c.h.b16 %v69
    %v113 = vunpack.c.l.b16 %v70
    %v114 = vunpack.c.h.b16 %v70
    %v115 = vunpack.c.l.b16 %v71
    %v116 = vunpack.c.h.b16 %v71
    %v117 = vunpack.c.l.b16 %v72
    %v118 = vunpack.c.h.b16 %v72
    %v119 = vunpack.c.l.b16 %v73
    %v120 = vunpack.c.h.b16 %v73
    %v121 = vunpack.c.l.b16 %v74
    %v122 = vunpack.c.h.b16 %v74
    %v123 = vunpack.c.l.b16 %v75
    %v124 = vunpack.c.h.b16 %v75
    %v125 = vunpack.c.l.b16 %v76
    %v126 = vunpack.c.h.b16 %v76
    %v127 = vunpack.c.l.b16 %v77
    %v128 = vunpack.c.h.b16 %v77
    %v129 = vunpack.c.l.b16 %v78
    %v130 = vunpack.c.h.b16 %v78
    %v131 = vunpack.c.l.b16 %v79
    %v132 = vunpack.c.h.b16 %v79
    %v133 = vunpack.c.l.b16 %v80
    %v134 = vunpack.c.h.b16 %v80
    %v135 = vpack.c.b16 %v105, %v103
    %v136 = vpack.c.b16 %v106, %v104
    %v137 = vpack.c.b16 %v109, %v107
    %v138 = vpack.c.b16 %v110, %v108
    %v139 = vpack.c.b16 %v113, %v111
    %v140 = vpack.c.b16 %v114, %v112
    %v141 = vpack.c.b16 %v117, %v115
    %v142 = vpack.c.b16 %v118, %v116
    %v143 = vpack.c.b16 %v121, %v119
    %v144 = vpack.c.b16 %v122, %v120
    %v145 = vpack.c.b16 %v125, %v123
    %v146 = vpack.c.b16 %v126, %v124
    %v147 = vpack.c.b16 %v129, %v127
    %v148 = vpack.c.b16 %v130, %v128
    %v149 = vpack.c.b16 %v133, %v131
    %v150 = vpack.c.b16 %v134, %v132
    %167 = vmatprep.subr.bf16.mxu0 %v136
    %168 = vmatpush1.bf16.msra.mxu0 %v135
    %169 = vmatprep.subr.bf16.mxu0 %v138
    %170 = vmatpush1.bf16.msra.mxu0 %v137
    %171 = vmatprep.subr.bf16.mxu0 %v140
    %172 = vmatpush1.bf16.msra.mxu0 %v139
    %173 = vmatprep.subr.bf16.mxu0 %v142
    %174 = vmatpush1.bf16.msra.mxu0 %v141
    %175 = vmatprep.subr.bf16.mxu0 %v144
    %176 = vmatpush1.bf16.msra.mxu0 %v143
    %177 = vmatprep.subr.bf16.mxu0 %v146
    %178 = vmatpush1.bf16.msra.mxu0 %v145
    %179 = vmatprep.subr.bf16.mxu0 %v148
    %180 = vmatpush1.bf16.msra.mxu0 %v147
    %181 = vmatprep.subr.bf16.mxu0 %v150
    %182 = vmatpush1.bf16.msra.mxu0 %v149
    %183 = vmatprep.subr.bf16.mxu0 0
    %184 = vmatpush1.bf16.msra.mxu0 0
    %185 = vmatprep.subr.bf16.mxu0 0
    %186 = vmatpush1.bf16.msra.mxu0 0
    %187 = vmatprep.subr.bf16.mxu0 0
    %188 = vmatpush1.bf16.msra.mxu0 0
    %189 = vmatprep.subr.bf16.mxu0 0
    %190 = vmatpush1.bf16.msra.mxu0 0
    %191 = vmatprep.subr.bf16.mxu0 0
    %192 = vmatpush1.bf16.msra.mxu0 0
    %193 = vmatprep.subr.bf16.mxu0 0
    %194 = vmatpush1.bf16.msra.mxu0 0
    %195 = vmatprep.subr.bf16.mxu0 0
    %196 = vmatpush1.bf16.msra.mxu0 0
    %197 = vmatprep.subr.bf16.mxu0 0
    %198 = vmatpush1.bf16.msra.mxu0 0
    %199 = vmatprep.mubr.bf16.mxu0 0
    %200 = vmatmul.mubr.bf16.gmra.mrb[0].mxu0 %v85
    %v201 = vpop.f32.mrb[0].mxu0
    %v202 = vadd.f32 0.0, %v201
    %v203 = vpop.f32.mrb[0].mxu0
    %v204 = vadd.f32 0.0, %v203
    %v205 = vpop.f32.mrb[0].mxu0
    %v206 = vadd.f32 0.0, %v205
    %v207 = vpop.f32.mrb[0].mxu0
    %v208 = vadd.f32 0.0, %v207
    %209 = vdwg.mxu0
    %v210 = vxor.u32 %v202, 2147483648
    %v211 = vxor.u32 %v206, 2147483648
    %v212 = vmul.f32 %v210, 1.442695
    %v213 = vpow.pop %v212
    %v214 = vmul.f32 %v211, 1.442695
    %v215 = vpow.pop %v214
    %v216 = vadd.f32 %v213, 1.0
    %v217 = vadd.f32 %v215, 1.0
    %v218 = vrcp.pop %v216
    %v219 = vmul.f32 1.0, %v218
    %v220 = vrcp.pop %v217
    %v221 = vmul.f32 1.0, %v220
    %v222 = vmul.f32 %v202, %v219
    %v223 = vmul.f32 %v206, %v221
    %v224 = vmul.f32 %v222, %v204
    %v225 = vmul.f32 %v223, %v208
    %v226 = vld [vmem:[#allocation2] sm:$0xff]
    %v227 = vld [vmem:[#allocation2 + $0x8] sm:$0xff]
    %v228 = vpack.c.bf16 %v225, %v224
    %v229 = vld [vmem:[#allocation8] sm:$0xf]
    %v230 = vld [vmem:[#allocation8 + $0x4] sm:$0xf]
    %v231 = vld [vmem:[#allocation8 + $0x8] sm:$0xf]
    %v232 = vld [vmem:[#allocation8 + $0xc] sm:$0xf]
    %v233 = vld [vmem:[#allocation8 + $0x10] sm:$0xf]
    %v234 = vld [vmem:[#allocation8 + $0x14] sm:$0xf]
    %v235 = vld [vmem:[#allocation8 + $0x18] sm:$0xf]
    %v236 = vld [vmem:[#allocation8 + $0x1c] sm:$0xf]
    %v237 = vld [vmem:[#allocation8 + $0x20] sm:$0xf]
    %v238 = vld [vmem:[#allocation8 + $0x24] sm:$0xf]
    %v239 = vld [vmem:[#allocation8 + $0x28] sm:$0xf]
    %v240 = vld [vmem:[#allocation8 + $0x2c] sm:$0xf]
    %v241 = vld [vmem:[#allocation8 + $0x30] sm:$0xf]
    %v242 = vld [vmem:[#allocation8 + $0x34] sm:$0xf]
    %v243 = vld [vmem:[#allocation8 + $0x38] sm:$0xf]
    %v244 = vld [vmem:[#allocation8 + $0x3c] sm:$0xf]
    %v261 = vunpack.c.l.b16 %v229
    %v262 = vunpack.c.l.b16 %v230
    %v263 = vunpack.c.l.b16 %v231
    %v264 = vunpack.c.l.b16 %v232
    %v265 = vunpack.c.l.b16 %v233
    %v266 = vunpack.c.l.b16 %v234
    %v267 = vunpack.c.l.b16 %v235
    %v268 = vunpack.c.l.b16 %v236
    %v269 = vunpack.c.l.b16 %v237
    %v270 = vunpack.c.l.b16 %v238
    %v271 = vunpack.c.l.b16 %v239
    %v272 = vunpack.c.l.b16 %v240
    %v273 = vunpack.c.l.b16 %v241
    %v274 = vunpack.c.l.b16 %v242
    %v275 = vunpack.c.l.b16 %v243
    %v276 = vunpack.c.l.b16 %v244
    %v277 = vpack.c.b16 %v262, %v261
    %v278 = vpack.c.b16 %v264, %v263
    %v279 = vpack.c.b16 %v266, %v265
    %v280 = vpack.c.b16 %v268, %v267
    %v281 = vpack.c.b16 %v270, %v269
    %v282 = vpack.c.b16 %v272, %v271
    %v283 = vpack.c.b16 %v274, %v273
    %v284 = vpack.c.b16 %v276, %v275
    %293 = vmatprep.subr.bf16.mxu0 0
    %294 = vmatpush1.bf16.msra.mxu0 %v277
    %295 = vmatprep.subr.bf16.mxu0 0
    %296 = vmatpush1.bf16.msra.mxu0 %v278
    %297 = vmatprep.subr.bf16.mxu0 0
    %298 = vmatpush1.bf16.msra.mxu0 %v279
    %299 = vmatprep.subr.bf16.mxu0 0
    %300 = vmatpush1.bf16.msra.mxu0 %v280
    %301 = vmatprep.subr.bf16.mxu0 0
    %302 = vmatpush1.bf16.msra.mxu0 %v281
    %303 = vmatprep.subr.bf16.mxu0 0
    %304 = vmatpush1.bf16.msra.mxu0 %v282
    %305 = vmatprep.subr.bf16.mxu0 0
    %306 = vmatpush1.bf16.msra.mxu0 %v283
    %307 = vmatprep.subr.bf16.mxu0 0
    %308 = vmatpush1.bf16.msra.mxu0 %v284
    %309 = vmatprep.subr.bf16.mxu0 0
    %310 = vmatpush1.bf16.msra.mxu0 0
    %311 = vmatprep.subr.bf16.mxu0 0
    %312 = vmatpush1.bf16.msra.mxu0 0
    %313 = vmatprep.subr.bf16.mxu0 0
    %314 = vmatpush1.bf16.msra.mxu0 0
    %315 = vmatprep.subr.bf16.mxu0 0
    %316 = vmatpush1.bf16.msra.mxu0 0
    %317 = vmatprep.subr.bf16.mxu0 0
    %318 = vmatpush1.bf16.msra.mxu0 0
    %319 = vmatprep.subr.bf16.mxu0 0
    %320 = vmatpush1.bf16.msra.mxu0 0
    %321 = vmatprep.subr.bf16.mxu0 0
    %322 = vmatpush1.bf16.msra.mxu0 0
    %323 = vmatprep.subr.bf16.mxu0 0
    %324 = vmatpush1.bf16.msra.mxu0 0
    %325 = vmatprep.mubr.bf16.mxu0 0
    %326 = vmatmul.mubr.bf16.gmra.mrb[0].mxu0 %v228
    %v327 = vpop.f32.mrb[0].mxu0
    %v328 = vadd.f32 0.0, %v327
    %v329 = vpop.f32.mrb[0].mxu0
    %v330 = vpop.f32.mrb[0].mxu0
    %v331 = vadd.f32 0.0, %v330
    %v332 = vpop.f32.mrb[0].mxu0
    %333 = vdwg.mxu0
    %v334 = vadd.f32 %v226, %v328
    %v335 = vadd.f32 %v227, %v331
    %336 = vst [vmem:[#allocation2] sm:$0xff] %v334
    %337 = vst [vmem:[#allocation2 + $0x8] sm:$0xff] %v335
    // Predicated region
    $region30: #{tpu_custom_call.1} parent=1 // pred_check
      %p338 = pneg %p57
    $region31: #{tpu_custom_call.1} parent=1 // pred_check_branch
      %340 = sbr.rel (%p338) target = $region33
    $region32: #{tpu_custom_call.1} parent=1 // pred_region
      %v341 = vld [vmem:[#allocation2] sm:$0xff]
      %v342 = vld [vmem:[#allocation2 + $0x8] sm:$0xff]
      %343 = vst [vmem:[#allocation9] sm:$0xff] %v341
      %344 = vst [vmem:[#allocation9 + $0x8] sm:$0xff] %v342
    $region33: #{tpu_custom_call.1} parent=1 // pred_fallthru
      _
    // Predicated region
    $region34: #{tpu_custom_call.1} parent=1 // pred_check
      _
    $region35: #{tpu_custom_call.1} parent=1 // pred_check_branch
      %346 = sbr.rel (0) target = $region37
    $region36: #{tpu_custom_call.1} parent=1 // pred_region
      %s348 = ssub.s32 256, 256
      %349 = vsyncadd [#allocation5], %s348
      %s350 = sshll.u32 [#allocation9], 4
      %s351 = int_to_ptr.vmem [resolvable:$true] %s350
      %356 = dma.vmem_to_hbm [thread:$0]  %s351, 256, %s3, [#allocation5], 128, 128, 8
    $region37: #{tpu_custom_call.1} parent=1 // pred_fallthru
      _
    // Predicated region
    $region38: #{tpu_custom_call.1} parent=1 // pred_check
      _
    $region39: #{tpu_custom_call.1} parent=1 // pred_check_branch
      %358 = sbr.rel (0) target = $region41
    $region40: #{tpu_custom_call.1} parent=1 // pred_region
      %359 = dma.done [#allocation5], 256
    $region41: #{tpu_custom_call.1} parent=1 // pred_fallthru
      _
    %360 = vsyncpa [#allocation4], 1
    %361 = vsyncpa [#allocation7], 1
    %362 = vsyncpa [#allocation5], 1

</llo_original>
